<compile_context>
chip_gen: v6e
topology: v6e:2x2x1
jax: 0.10.0
libtpu: 0.0.40
codegen_flags: <defaults>
</compile_context>

<pallas_src>
import jax
import jax.numpy as jnp
from jax.experimental import pallas as pl
from jax.experimental.pallas import tpu as pltpu

PACK = 16                      # original batch rows folded into each lane-dense packed row
_TILE_ROW_QUANTUM = PACK * 16  # 256 rows: keeps the packed sublane dim 16-aligned (bf16-safe)


def _round_up(n, m):
    return ((n + m - 1) // m) * m


def _cdiv(a, b):
    return -(-a // b)


def _block_diag(w, n):
    # (in, out) -> (n*in, n*out) block-diagonal expansion: kron(I_n, W).
    return jnp.kron(jnp.eye(n, dtype=w.dtype), w)


# --------------------------------------------------------------------------- #
# Kernels
# --------------------------------------------------------------------------- #
def _mlp_kernel_split(x_ref, w1h_ref, b1h_ref, w2lo_ref, w2hi_ref, b2_ref, o_ref):
    # x_ref:   (tbp, 2*KH)         f32   (KH = 8*in_dim, a multiple of 128)
    # w1h_ref: (KH, 8*hid)         bf16  = kron(I_8, W1)          (VMEM-resident)
    # b1h_ref: (1, 8*hid)          f32
    # w2lo_ref:(8*hid, PACK*out)   bf16  = [kron(I_8, W2) | 0]    (VMEM-resident)
    # w2hi_ref:(8*hid, PACK*out)   bf16  = [0 | kron(I_8, W2)]    (VMEM-resident)
    # b2_ref:  (1, PACK*out)       f32
    # o_ref:   (tbp, PACK*out)     f32 or bf16 (lane-dense: PACK*out == 128)
    kh = w1h_ref.shape[0]
    x = x_ref[...].astype(jnp.bfloat16)              # in-kernel bf16 cast (review item 1)
    x_lo = x[:, :kh]                                  # 128-lane-aligned static slices
    x_hi = x[:, kh:]
    # Two half-K dots skip the all-zero quadrants of kron(I_16, W1).
    h_lo = jnp.dot(x_lo, w1h_ref[...], preferred_element_type=jnp.float32)
    h_hi = jnp.dot(x_hi, w1h_ref[...], preferred_element_type=jnp.float32)
    h_lo = jnp.maximum(h_lo + b1h_ref[...], 0.0).astype(jnp.bfloat16)
    h_hi = jnp.maximum(h_hi + b1h_ref[...], 0.0).astype(jnp.bfloat16)
    # Layer 2 as two half-K dots summed (zero-padded halves keep the output
    # lane-dense without any concat / relayout).
    y = (jnp.dot(h_lo, w2lo_ref[...], preferred_element_type=jnp.float32)
         + jnp.dot(h_hi, w2hi_ref[...], preferred_element_type=jnp.float32))
    o_ref[...] = jnp.maximum(y + b2_ref[...], 0.0).astype(o_ref.dtype)


def _mlp_kernel_full(x_ref, w1_ref, b1_ref, w2_ref, b2_ref, o_ref):
    # Fallback (used when the half-x split would not be 128-lane aligned).
    x = x_ref[...].astype(jnp.bfloat16)
    h = jnp.dot(x, w1_ref[...], preferred_element_type=jnp.float32)
    h = jnp.maximum(h + b1_ref[...], 0.0).astype(jnp.bfloat16)
    y = jnp.dot(h, w2_ref[...], preferred_element_type=jnp.float32)
    o_ref[...] = jnp.maximum(y + b2_ref[...], 0.0).astype(o_ref.dtype)


# --------------------------------------------------------------------------- #
# Parameter packing (one-time)
# --------------------------------------------------------------------------- #
def pack_params(w1, b1, w2, b2, pack=PACK):
    """Block-diagonal bf16 weights / tiled f32 biases for the packed layout."""
    in_dim, hid = w1.shape
    out_dim = w2.shape[1]
    half = pack // 2
    split = (half * in_dim) % 128 == 0       # half-x slice must be lane aligned

    if split:
        w1h = _block_diag(w1, half).astype(jnp.bfloat16)            # (half*in, half*hid)
        b1h = jnp.tile(jnp.reshape(b1, (1, hid)), (1, half)).astype(jnp.float32)
        w2h = _block_diag(w2, half).astype(jnp.bfloat16)            # (half*hid, half*out)
        zeros = jnp.zeros_like(w2h)
        w2lo = jnp.concatenate([w2h, zeros], axis=1)                # -> output cols [0, half*out)
        w2hi = jnp.concatenate([zeros, w2h], axis=1)                # -> output cols [half*out, pack*out)
        b2p = jnp.tile(jnp.reshape(b2, (1, out_dim)), (1, pack)).astype(jnp.float32)
        return True, (w1h, b1h, w2lo, w2hi, b2p)

    w1p = _block_diag(w1, pack).astype(jnp.bfloat16)
    b1p = jnp.tile(jnp.reshape(b1, (1, hid)), (1, pack)).astype(jnp.float32)
    w2p = _block_diag(w2, pack).astype(jnp.bfloat16)
    b2p = jnp.tile(jnp.reshape(b2, (1, out_dim)), (1, pack)).astype(jnp.float32)
    return False, (w1p, b1p, w2p, b2p)


# --------------------------------------------------------------------------- #
# Forward wrapper
# --------------------------------------------------------------------------- #
def diabetes_client_embedding_forward(x, w1, b1, w2, b2, *,
                                      max_rows_per_tile=32768,
                                      single_tile_max_rows=4096,
                                      out_dtype=jnp.float32,
                                      x_buffers=2):
    """x: [B, input_dim] f32 -> [B, output_dim] = relu(relu(x@W1+b1)@W2+b2).

    out_dtype=jnp.bfloat16 halves the output HBM stream (f32 default preserves
    the original module's dtype contract).
    """
    batch, in_dim = x.shape
    out_dim = w2.shape[1]

    split, params = pack_params(w1, b1, w2, b2)
    kernel = _mlp_kernel_split if split else _mlp_kernel_full

    # ---- batch tiling --------------------------------------------------------
    packed_batch = _round_up(batch, PACK)             # rows after PACK grouping
    if packed_batch <= min(single_tile_max_rows, max_rows_per_tile):
        # Small batch: single full-array block (no sublane-divisibility needed).
        num_tiles = 1
        rows_per_tile = packed_batch
    else:
        # Large batch: at least 2 grid steps (v7x megacore + DMA/compute
        # overlap), blocks as close to max_rows_per_tile as possible, rounded
        # to 256 original rows so the packed sublane dim stays 16-aligned.
        num_tiles = max(2, _cdiv(packed_batch, max_rows_per_tile))
        rows_per_tile = _round_up(_cdiv(packed_batch, num_tiles), _TILE_ROW_QUANTUM)
    batch_pad = num_tiles * rows_per_tile

    # Pad ONLY for ragged batches.  When batch is already PACK/tile aligned
    # (the common case), x and y are only touched by free row-major reshapes —
    # no extra HBM passes outside the kernel.
    padded = batch_pad != batch
    if padded:
        x = jnp.pad(x, ((0, batch_pad - batch), (0, 0)))

    xp = x.reshape(batch_pad // PACK, PACK * in_dim)   # free view; stays f32
    tbp = rows_per_tile // PACK

    x_spec_kwargs = {}
    if x_buffers != 2:
        # Optional deeper input pipelining if DMA is still exposed.
        x_spec_kwargs["pipeline_mode"] = pl.Buffered(x_buffers)
    in_specs = [pl.BlockSpec((tbp, PACK * in_dim), lambda i: (i, 0), **x_spec_kwargs)]
    # Weights/biases: constant index_map -> VMEM-resident, never re-fetched.
    in_specs += [pl.BlockSpec(p.shape, lambda i: (0, 0)) for p in params]

    yp = pl.pallas_call(
        kernel,
        out_shape=jax.ShapeDtypeStruct((batch_pad // PACK, PACK * out_dim), out_dtype),
        grid=(num_tiles,),
        in_specs=in_specs,
        out_specs=pl.BlockSpec((tbp, PACK * out_dim), lambda i: (i, 0)),
        compiler_params=pltpu.CompilerParams(
            dimension_semantics=("parallel",),
            vmem_limit_bytes=48 * 1024 * 1024),
    )(xp, *params)

    y = yp.reshape(batch_pad, out_dim)                 # free view
    if padded:
        y = y[:batch]
    return y


# --------------------------------------------------------------------------- #
# torch.nn.Linear-style init
# --------------------------------------------------------------------------- #
def init_params(key, input_dim, hidden_dim=24, output_dim=8):
    k1, k2, k3, k4 = jax.random.split(key, 4)
    bound1 = 1.0 / jnp.sqrt(input_dim)
    bound2 = 1.0 / jnp.sqrt(hidden_dim)
    w1 = jax.random.uniform(k1, (input_dim, hidden_dim), jnp.float32, -bound1, bound1)
    b1 = jax.random.uniform(k2, (1, hidden_dim), jnp.float32, -bound1, bound1)
    w2 = jax.random.uniform(k3, (hidden_dim, output_dim), jnp.float32, -bound2, bound2)
    b2 = jax.random.uniform(k4, (1, output_dim), jnp.float32, -bound2, bound2)
    return w1, b1, w2, b2


if __name__ == "__main__":
    key = jax.random.PRNGKey(0)
    kx1, kx2, kx3, kp = jax.random.split(key, 4)

    input_dim, hidden_dim, output_dim = 16, 24, 8
    w1, b1, w2, b2 = init_params(kp, input_dim, hidden_dim, output_dim)
    w1b, w2b = w1.astype(jnp.bfloat16), w2.astype(jnp.bfloat16)

    def ref_bf16(x):
        # Same precision recipe as the kernel: bf16 operands, f32 accumulation.
        h = jnp.dot(x.astype(jnp.bfloat16), w1b, preferred_element_type=jnp.float32) + b1
        h = jnp.maximum(h, 0.0)
        y = jnp.dot(h.astype(jnp.bfloat16), w2b, preferred_element_type=jnp.float32) + b2
        return jnp.maximum(y, 0.0)

    def ref_f32(x):
        return jnp.maximum(jnp.maximum(x @ w1 + b1, 0.0) @ w2 + b2, 0.0)

    # 1) Tiny sub-PACK batch: single full-array block, ragged-tail fallback.
    x_small = jax.random.normal(kx1, (8, input_dim), jnp.float32)
    out_small = jax.block_until_ready(
        diabetes_client_embedding_forward(x_small, w1, b1, w2, b2))
    assert out_small.shape == (8, output_dim)
    assert jnp.allclose(out_small, ref_bf16(x_small), atol=5e-3, rtol=5e-3)
    assert jnp.allclose(out_small, ref_f32(x_small), atol=5e-2, rtol=5e-2)

    # 2) PACK/tile-aligned batch: multi-tile pipeline, zero pad / zero slice
    #    (tile forced small so several grid steps run).
    x_al = jax.random.normal(kx2, (1024, input_dim), jnp.float32)
    out_al = jax.block_until_ready(
        diabetes_client_embedding_forward(x_al, w1, b1, w2, b2, max_rows_per_tile=256))
    assert out_al.shape == (1024, output_dim)
    assert jnp.allclose(out_al, ref_bf16(x_al), atol=5e-3, rtol=5e-3)
    assert jnp.allclose(out_al, ref_f32(x_al), atol=5e-2, rtol=5e-2)

    # 3) Ragged batch: exercises the documented pad+slice fallback path.
    x_rag = jax.random.normal(kx3, (1000, input_dim), jnp.float32)
    out_rag = jax.block_until_ready(
        diabetes_client_embedding_forward(x_rag, w1, b1, w2, b2))
    assert out_rag.shape == (1000, output_dim)
    assert jnp.allclose(out_rag, ref_bf16(x_rag), atol=5e-3, rtol=5e-3)

    # 4) Optional bf16 output stream (gated behind out_dtype flag).
    out_bf16 = jax.block_until_ready(
        diabetes_client_embedding_forward(x_al, w1, b1, w2, b2, out_dtype=jnp.bfloat16))
    assert out_bf16.dtype == jnp.bfloat16
    assert jnp.allclose(out_bf16.astype(jnp.float32), ref_bf16(x_al), atol=2e-2, rtol=2e-2)

    print("KERNEL_OK")
</pallas_src>

<mosaic_0001>
module attributes {stable_mosaic.version = 11 : i64} {
  func.func @_mlp_kernel_split(%arg0: i32, %arg1: memref<1x256xf32, #tpu.memory_space<vmem>>, %arg2: memref<128x192xbf16, #tpu.memory_space<vmem>>, %arg3: memref<1x192xf32, #tpu.memory_space<vmem>>, %arg4: memref<192x128xbf16, #tpu.memory_space<vmem>>, %arg5: memref<192x128xbf16, #tpu.memory_space<vmem>>, %arg6: memref<1x128xf32, #tpu.memory_space<vmem>>, %arg7: memref<1x128xf32, #tpu.memory_space<vmem>>) attributes {dimension_semantics = [#tpu.dimension_semantics<parallel>], iteration_bounds = array<i64: 1>, scalar_prefetch = 0 : i64, scratch_operands = 0 : i64, tpu.core_type = #tpu.core_type<tc>, window_params = [{transform_indices = @transform_0, window_bounds = array<i64: 1, 256>}, {pipeline_mode = #tpu.pipeline_mode<synchronous>, transform_indices = @transform_1, window_bounds = array<i64: 128, 192>}, {pipeline_mode = #tpu.pipeline_mode<synchronous>, transform_indices = @transform_2, window_bounds = array<i64: 1, 192>}, {pipeline_mode = #tpu.pipeline_mode<synchronous>, transform_indices = @transform_3, window_bounds = array<i64: 192, 128>}, {pipeline_mode = #tpu.pipeline_mode<synchronous>, transform_indices = @transform_4, window_bounds = array<i64: 192, 128>}, {pipeline_mode = #tpu.pipeline_mode<synchronous>, transform_indices = @transform_5, window_bounds = array<i64: 1, 128>}, {transform_indices = @transform_6, window_bounds = array<i64: 1, 128>}]} {
    %c0 = arith.constant 0 : index
    %c0_0 = arith.constant 0 : index
    %0 = vector.load %arg1[%c0, %c0_0] : memref<1x256xf32, #tpu.memory_space<vmem>>, vector<1x256xf32>
    %1 = arith.truncf %0 : vector<1x256xf32> to vector<1x256xbf16>
    %2 = vector.extract_strided_slice %1 {offsets = [0, 0], sizes = [1, 128], strides = [1, 1]} : vector<1x256xbf16> to vector<1x128xbf16>
    %3 = vector.extract_strided_slice %1 {offsets = [0, 128], sizes = [1, 128], strides = [1, 1]} : vector<1x256xbf16> to vector<1x128xbf16>
    %c0_1 = arith.constant 0 : index
    %c0_2 = arith.constant 0 : index
    %4 = vector.load %arg2[%c0_1, %c0_2] : memref<128x192xbf16, #tpu.memory_space<vmem>>, vector<128x192xbf16>
    %cst = arith.constant dense<0.000000e+00> : vector<1x192xf32>
    %5 = tpu.matmul %2, %4, %cst {dimension_numbers = #tpu.dot_dimension_numbers<[1], [0], [0], [1], [0, 0, 1, 1], [], []>} : vector<1x128xbf16>, vector<128x192xbf16>, vector<1x192xf32> -> vector<1x192xf32>
    %c0_3 = arith.constant 0 : index
    %c0_4 = arith.constant 0 : index
    %6 = vector.load %arg2[%c0_3, %c0_4] : memref<128x192xbf16, #tpu.memory_space<vmem>>, vector<128x192xbf16>
    %cst_5 = arith.constant dense<0.000000e+00> : vector<1x192xf32>
    %7 = tpu.matmul %3, %6, %cst_5 {dimension_numbers = #tpu.dot_dimension_numbers<[1], [0], [0], [1], [0, 0, 1, 1], [], []>} : vector<1x128xbf16>, vector<128x192xbf16>, vector<1x192xf32> -> vector<1x192xf32>
    %c0_6 = arith.constant 0 : index
    %c0_7 = arith.constant 0 : index
    %8 = vector.load %arg3[%c0_6, %c0_7] : memref<1x192xf32, #tpu.memory_space<vmem>>, vector<1x192xf32>
    %9 = arith.addf %5, %8 : vector<1x192xf32>
    %cst_8 = arith.constant 0.000000e+00 : f32
    %10 = vector.broadcast %cst_8 : f32 to vector<1x192xf32>
    %11 = arith.maximumf %9, %10 : vector<1x192xf32>
    %12 = arith.truncf %11 : vector<1x192xf32> to vector<1x192xbf16>
    %c0_9 = arith.constant 0 : index
    %c0_10 = arith.constant 0 : index
    %13 = vector.load %arg3[%c0_9, %c0_10] : memref<1x192xf32, #tpu.memory_space<vmem>>, vector<1x192xf32>
    %14 = arith.addf %7, %13 : vector<1x192xf32>
    %cst_11 = arith.constant 0.000000e+00 : f32
    %15 = vector.broadcast %cst_11 : f32 to vector<1x192xf32>
    %16 = arith.maximumf %14, %15 : vector<1x192xf32>
    %17 = arith.truncf %16 : vector<1x192xf32> to vector<1x192xbf16>
    %c0_12 = arith.constant 0 : index
    %c0_13 = arith.constant 0 : index
    %18 = vector.load %arg4[%c0_12, %c0_13] : memref<192x128xbf16, #tpu.memory_space<vmem>>, vector<192x128xbf16>
    %cst_14 = arith.constant dense<0.000000e+00> : vector<1x128xf32>
    %19 = tpu.matmul %12, %18, %cst_14 {dimension_numbers = #tpu.dot_dimension_numbers<[1], [0], [0], [1], [0, 0, 1, 1], [], []>} : vector<1x192xbf16>, vector<192x128xbf16>, vector<1x128xf32> -> vector<1x128xf32>
    %c0_15 = arith.constant 0 : index
    %c0_16 = arith.constant 0 : index
    %20 = vector.load %arg5[%c0_15, %c0_16] : memref<192x128xbf16, #tpu.memory_space<vmem>>, vector<192x128xbf16>
    %cst_17 = arith.constant dense<0.000000e+00> : vector<1x128xf32>
    %21 = tpu.matmul %17, %20, %cst_17 {dimension_numbers = #tpu.dot_dimension_numbers<[1], [0], [0], [1], [0, 0, 1, 1], [], []>} : vector<1x192xbf16>, vector<192x128xbf16>, vector<1x128xf32> -> vector<1x128xf32>
    %22 = arith.addf %19, %21 : vector<1x128xf32>
    %c0_18 = arith.constant 0 : index
    %c0_19 = arith.constant 0 : index
    %23 = vector.load %arg6[%c0_18, %c0_19] : memref<1x128xf32, #tpu.memory_space<vmem>>, vector<1x128xf32>
    %24 = arith.addf %22, %23 : vector<1x128xf32>
    %cst_20 = arith.constant 0.000000e+00 : f32
    %25 = vector.broadcast %cst_20 : f32 to vector<1x128xf32>
    %26 = arith.maximumf %24, %25 : vector<1x128xf32>
    %c0_21 = arith.constant 0 : index
    %c0_22 = arith.constant 0 : index
    %27 = vector.load %arg7[%c0_21, %c0_22] : memref<1x128xf32, #tpu.memory_space<vmem>>, vector<1x128xf32>
    tpu.vector_store %arg7[%c0_21, %c0_22], %26 {strides = array<i32>} : memref<1x128xf32, #tpu.memory_space<vmem>>, vector<1x128xf32>,
    return
  }
  func.func @transform_0(%arg0: i32) -> (i32, i32) {
    %c0_i32 = arith.constant 0 : i32
    %c0_i32_0 = arith.constant 0 : i32
    return %arg0, %c0_i32 : i32, i32
  }
  func.func @transform_1(%arg0: i32) -> (i32, i32) {
    %c0_i32 = arith.constant 0 : i32
    %c0_i32_0 = arith.constant 0 : i32
    %c0_i32_1 = arith.constant 0 : i32
    return %c0_i32, %c0_i32_0 : i32, i32
  }
  func.func @transform_2(%arg0: i32) -> (i32, i32) {
    %c0_i32 = arith.constant 0 : i32
    %c0_i32_0 = arith.constant 0 : i32
    %c0_i32_1 = arith.constant 0 : i32
    return %c0_i32, %c0_i32_0 : i32, i32
  }
  func.func @transform_3(%arg0: i32) -> (i32, i32) {
    %c0_i32 = arith.constant 0 : i32
    %c0_i32_0 = arith.constant 0 : i32
    %c0_i32_1 = arith.constant 0 : i32
    return %c0_i32, %c0_i32_0 : i32, i32
  }
  func.func @transform_4(%arg0: i32) -> (i32, i32) {
    %c0_i32 = arith.constant 0 : i32
    %c0_i32_0 = arith.constant 0 : i32
    %c0_i32_1 = arith.constant 0 : i32
    return %c0_i32, %c0_i32_0 : i32, i32
  }
  func.func @transform_5(%arg0: i32) -> (i32, i32) {
    %c0_i32 = arith.constant 0 : i32
    %c0_i32_0 = arith.constant 0 : i32
    %c0_i32_1 = arith.constant 0 : i32
    return %c0_i32, %c0_i32_0 : i32, i32
  }
  func.func @transform_6(%arg0: i32) -> (i32, i32) {
    %c0_i32 = arith.constant 0 : i32
    %c0_i32_0 = arith.constant 0 : i32
    return %arg0, %c0_i32 : i32, i32
  }
}

</mosaic_0001>

<llo_original>
// kernel: tpu_custom_call.1
$region0: #{tpu_custom_call.1}
  #allocation0 [shape = 'u32[]', space=smem, size = 0x4, offset = 0x4, fixed_abs, tag = 'smem constant byte address 0x4 - core index']
  #allocation1 [shape = 'u32[144,128]{1,0:T(1,128)}', space=vmem, size = 0x12000, scoped, tag = 'internal scratch']
  %s0 = inlined_call_operand.vmem [shape: f32[1,256], index: 0, kind: input, shape index: {}]
  %s1 = inlined_call_operand.vmem [shape: bf16[128,192], index: 1, kind: input, shape index: {}]
  %s2 = inlined_call_operand.vmem [shape: f32[1,192], index: 2, kind: input, shape index: {}]
  %s3 = inlined_call_operand.vmem [shape: bf16[192,128], index: 3, kind: input, shape index: {}]
  %s4 = inlined_call_operand.vmem [shape: bf16[192,128], index: 4, kind: input, shape index: {}]
  %s5 = inlined_call_operand.vmem [shape: f32[1,128], index: 5, kind: input, shape index: {}]
  %s6 = inlined_call_operand.hbm [shape: f32[1,128], index: 6, kind: output, shape index: {}]
  %s7 = sld [smem:[#allocation0]]
  $region34: #{tpu_custom_call.1} parent=0
    _
  %s9 = ssub.s32 1, %s7
  %s10 = scalar_select 0, %s9, %s7
  $region1: #{tpu_custom_call.1} parent=0
    #allocation2 [shape = 'u8[512]{0}', space=vmem, size = 0x400, scoped, tag = 'output window, operand 0, single buffered']
    #allocation3 [shape = 's32[1]{0}', space=sflag, size = 0x4, scoped, tag = 'scoped memory for tpu_custom_call.1']
    %11 = vsyncpa [#allocation3], 0
    // Predicated region
    $region2: #{tpu_custom_call.1} parent=1 // pred_check
      _
    $region3: #{tpu_custom_call.1} parent=1 // pred_check_branch
      %13 = sbr.rel (0) target = $region5
    $region4: #{tpu_custom_call.1} parent=1 // pred_region
      _
    $region5: #{tpu_custom_call.1} parent=1 // pred_fallthru
      _
    // Predicated region
    $region6: #{tpu_custom_call.1} parent=1 // pred_check
      _
    $region7: #{tpu_custom_call.1} parent=1 // pred_check_branch
      %15 = sbr.rel (0) target = $region9
    $region8: #{tpu_custom_call.1} parent=1 // pred_region
      _
    $region9: #{tpu_custom_call.1} parent=1 // pred_fallthru
      _
    // Predicated region
    $region10: #{tpu_custom_call.1} parent=1 // pred_check
      _
    $region11: #{tpu_custom_call.1} parent=1 // pred_check_branch
      %17 = sbr.rel (0) target = $region13
    $region12: #{tpu_custom_call.1} parent=1 // pred_region
      _
    $region13: #{tpu_custom_call.1} parent=1 // pred_fallthru
      _
    // Predicated region
    $region14: #{tpu_custom_call.1} parent=1 // pred_check
      _
    $region15: #{tpu_custom_call.1} parent=1 // pred_check_branch
      %19 = sbr.rel (0) target = $region17
    $region16: #{tpu_custom_call.1} parent=1 // pred_region
      _
    $region17: #{tpu_custom_call.1} parent=1 // pred_fallthru
      _
    // Predicated region
    $region18: #{tpu_custom_call.1} parent=1 // pred_check
      _
    $region19: #{tpu_custom_call.1} parent=1 // pred_check_branch
      %21 = sbr.rel (0) target = $region21
    $region20: #{tpu_custom_call.1} parent=1 // pred_region
      _
    $region21: #{tpu_custom_call.1} parent=1 // pred_fallthru
      _
    // Predicated region
    $region22: #{tpu_custom_call.1} parent=1 // pred_check
      _
    $region23: #{tpu_custom_call.1} parent=1 // pred_check_branch
      %23 = sbr.rel (0) target = $region25
    $region24: #{tpu_custom_call.1} parent=1 // pred_region
      _
    $region25: #{tpu_custom_call.1} parent=1 // pred_fallthru
      _
    %v25 = vld [vmem:[%s0] sm:$0x3]
    %v27 = vlaneseq
    %v28 = vshrl.u32 %v27, 7
    %v29 = vsub.s32 0, %v28
    %v30 = vrot.slane %v25, %v29
    %v31 = vlaneseq
    %v32 = vshrl.u32 %v31, 7
    %v33 = vsub.s32 1, %v32
    %v34 = vrot.slane %v25, %v33
    %v37 = vpack.c.bf16 %v30, %v30
    %v38 = vpack.c.bf16 %v34, %v34
    %v39 = vld [vmem:[%s1] sm:$0xff]
    %v40 = vld [vmem:[%s1 + $0x8] sm:$0xff]
    %v41 = vld [vmem:[%s1 + $0x10] sm:$0xff]
    %v42 = vld [vmem:[%s1 + $0x18] sm:$0xff]
    %v43 = vld [vmem:[%s1 + $0x20] sm:$0xff]
    %v44 = vld [vmem:[%s1 + $0x28] sm:$0xff]
    %v45 = vld [vmem:[%s1 + $0x30] sm:$0xff]
    %v46 = vld [vmem:[%s1 + $0x38] sm:$0xff]
    %v47 = vld [vmem:[%s1 + $0x40] sm:$0xff]
    %v48 = vld [vmem:[%s1 + $0x48] sm:$0xff]
    %v49 = vld [vmem:[%s1 + $0x50] sm:$0xff]
    %v50 = vld [vmem:[%s1 + $0x58] sm:$0xff]
    %v51 = vld [vmem:[%s1 + $0x60] sm:$0xff]
    %v52 = vld [vmem:[%s1 + $0x68] sm:$0xff]
    %v53 = vld [vmem:[%s1 + $0x70] sm:$0xff]
    %v54 = vld [vmem:[%s1 + $0x78] sm:$0xff]
    %v55 = vld [vmem:[%s2] sm:$0x3]
    %v72 = vunpack.c.l.b16 %v39
    %v73 = vunpack.c.h.b16 %v39
    %v74 = vunpack.c.l.b16 %v40
    %v75 = vunpack.c.h.b16 %v40
    %v76 = vunpack.c.l.b16 %v41
    %v77 = vunpack.c.h.b16 %v41
    %v78 = vunpack.c.l.b16 %v42
    %v79 = vunpack.c.h.b16 %v42
    %v80 = vunpack.c.l.b16 %v43
    %v81 = vunpack.c.h.b16 %v43
    %v82 = vunpack.c.l.b16 %v44
    %v83 = vunpack.c.h.b16 %v44
    %v84 = vunpack.c.l.b16 %v45
    %v85 = vunpack.c.h.b16 %v45
    %v86 = vunpack.c.l.b16 %v46
    %v87 = vunpack.c.h.b16 %v46
    %v88 = vunpack.c.l.b16 %v47
    %v89 = vunpack.c.h.b16 %v47
    %v90 = vunpack.c.l.b16 %v48
    %v91 = vunpack.c.h.b16 %v48
    %v92 = vunpack.c.l.b16 %v49
    %v93 = vunpack.c.h.b16 %v49
    %v94 = vunpack.c.l.b16 %v50
    %v95 = vunpack.c.h.b16 %v50
    %v96 = vunpack.c.l.b16 %v51
    %v97 = vunpack.c.h.b16 %v51
    %v98 = vunpack.c.l.b16 %v52
    %v99 = vunpack.c.h.b16 %v52
    %v100 = vunpack.c.l.b16 %v53
    %v101 = vunpack.c.h.b16 %v53
    %v102 = vunpack.c.l.b16 %v54
    %v103 = vunpack.c.h.b16 %v54
    %v104 = vpack.c.b16 %v74, %v72
    %v105 = vpack.c.b16 %v75, %v73
    %v106 = vpack.c.b16 %v78, %v76
    %v107 = vpack.c.b16 %v79, %v77
    %v108 = vpack.c.b16 %v82, %v80
    %v109 = vpack.c.b16 %v83, %v81
    %v110 = vpack.c.b16 %v86, %v84
    %v111 = vpack.c.b16 %v87, %v85
    %v112 = vpack.c.b16 %v90, %v88
    %v113 = vpack.c.b16 %v91, %v89
    %v114 = vpack.c.b16 %v94, %v92
    %v115 = vpack.c.b16 %v95, %v93
    %v116 = vpack.c.b16 %v98, %v96
    %v117 = vpack.c.b16 %v99, %v97
    %v118 = vpack.c.b16 %v102, %v100
    %v119 = vpack.c.b16 %v103, %v101
    %v137 = vlaneseq
    %v138 = vshrl.u32 %v137, 7
    %v139 = vsub.s32 0, %v138
    %v140 = vrot.slane %v55, %v139
    %v141 = vlaneseq
    %v142 = vshrl.u32 %v141, 7
    %v143 = vsub.s32 1, %v142
    %v144 = vrot.slane %v55, %v143
    %147 = vmatprep.subr.bf16.mxu0 %v119
    %148 = vmatpush1.bf16.msra.mxu0 %v118
    %149 = vmatprep.subr.bf16.mxu0 %v117
    %150 = vmatpush1.bf16.msra.mxu0 %v116
    %151 = vmatprep.subr.bf16.mxu0 %v115
    %152 = vmatpush1.bf16.msra.mxu0 %v114
    %153 = vmatprep.subr.bf16.mxu0 %v113
    %154 = vmatpush1.bf16.msra.mxu0 %v112
    %155 = vmatprep.subr.bf16.mxu0 %v111
    %156 = vmatpush1.bf16.msra.mxu0 %v110
    %157 = vmatprep.subr.bf16.mxu0 %v109
    %158 = vmatpush1.bf16.msra.mxu0 %v108
    %159 = vmatprep.subr.bf16.mxu0 %v107
    %160 = vmatpush1.bf16.msra.mxu0 %v106
    %161 = vmatprep.subr.bf16.mxu0 %v105
    %162 = vmatpush1.bf16.msra.mxu0 %v104
    %163 = vmatprep.subr.bf16.mxu0 0
    %164 = vmatpush2.bf16.msra.mxu0 0
    %165 = vmatprep.subr.bf16.mxu0 0
    %166 = vmatpush2.bf16.msra.mxu0 0
    %167 = vmatprep.subr.bf16.mxu0 0
    %168 = vmatpush2.bf16.msra.mxu0 0
    %169 = vmatprep.subr.bf16.mxu0 0
    %170 = vmatpush2.bf16.msra.mxu0 0
    %171 = vmatprep.subr.bf16.mxu0 0
    %172 = vmatpush2.bf16.msra.mxu0 0
    %173 = vmatprep.subr.bf16.mxu0 0
    %174 = vmatpush2.bf16.msra.mxu0 0
    %175 = vmatprep.subr.bf16.mxu0 0
    %176 = vmatpush2.bf16.msra.mxu0 0
    %177 = vmatprep.subr.bf16.mxu0 0
    %178 = vmatpush2.bf16.msra.mxu0 0
    %179 = vmatprep.mubr.bf16.mxu0 0
    %180 = vmatmul.mubr.bf16.gmra.mxu0 %v37
    %v181 = vpop.f32.mrf.mxu0
    %v182 = vadd.f32 %v140, %v181
    %v183 = vpop.f32.mrf.mxu0
    %v184 = vadd.f32 %v144, %v183
    %v185 = vpop.f32.mrf.mxu0
    %v186 = vpop.f32.mrf.mxu0
    %187 = vdwg.mxu0
    %v188 = vmax.f32 %v182, 0.0
    %v189 = vmax.f32 %v184, 0.0
    %v190 = vpack.c.bf16 %v188, %v188
    %v191 = vpack.c.bf16 %v189, %v189
    %192 = vmatprep.subr.bf16.mxu0 %v119
    %193 = vmatpush1.bf16.msra.mxu0 %v118
    %194 = vmatprep.subr.bf16.mxu0 %v117
    %195 = vmatpush1.bf16.msra.mxu0 %v116
    %196 = vmatprep.subr.bf16.mxu0 %v115
    %197 = vmatpush1.bf16.msra.mxu0 %v114
    %198 = vmatprep.subr.bf16.mxu0 %v113
    %199 = vmatpush1.bf16.msra.mxu0 %v112
    %200 = vmatprep.subr.bf16.mxu0 %v111
    %201 = vmatpush1.bf16.msra.mxu0 %v110
    %202 = vmatprep.subr.bf16.mxu0 %v109
    %203 = vmatpush1.bf16.msra.mxu0 %v108
    %204 = vmatprep.subr.bf16.mxu0 %v107
    %205 = vmatpush1.bf16.msra.mxu0 %v106
    %206 = vmatprep.subr.bf16.mxu0 %v105
    %207 = vmatpush1.bf16.msra.mxu0 %v104
    %208 = vmatprep.subr.bf16.mxu0 0
    %209 = vmatpush2.bf16.msra.mxu0 0
    %210 = vmatprep.subr.bf16.mxu0 0
    %211 = vmatpush2.bf16.msra.mxu0 0
    %212 = vmatprep.subr.bf16.mxu0 0
    %213 = vmatpush2.bf16.msra.mxu0 0
    %214 = vmatprep.subr.bf16.mxu0 0
    %215 = vmatpush2.bf16.msra.mxu0 0
    %216 = vmatprep.subr.bf16.mxu0 0
    %217 = vmatpush2.bf16.msra.mxu0 0
    %218 = vmatprep.subr.bf16.mxu0 0
    %219 = vmatpush2.bf16.msra.mxu0 0
    %220 = vmatprep.subr.bf16.mxu0 0
    %221 = vmatpush2.bf16.msra.mxu0 0
    %222 = vmatprep.subr.bf16.mxu0 0
    %223 = vmatpush2.bf16.msra.mxu0 0
    %224 = vmatprep.mubr.bf16.mxu0 0
    %225 = vmatmul.mubr.bf16.gmra.mxu0 %v38
    %v226 = vpop.f32.mrf.mxu0
    %v227 = vadd.f32 %v140, %v226
    %v228 = vpop.f32.mrf.mxu0
    %v229 = vadd.f32 %v144, %v228
    %v230 = vpop.f32.mrf.mxu0
    %v231 = vpop.f32.mrf.mxu0
    %232 = vdwg.mxu0
    %v233 = vmax.f32 %v227, 0.0
    %v234 = vmax.f32 %v229, 0.0
    %v235 = vpack.c.bf16 %v233, %v233
    %v236 = vpack.c.bf16 %v234, %v234
    %v237 = vld [vmem:[%s3] sm:$0xf]
    %v238 = vld [vmem:[%s3 + $0x4] sm:$0xf]
    %v239 = vld [vmem:[%s3 + $0x8] sm:$0xf]
    %v240 = vld [vmem:[%s3 + $0xc] sm:$0xf]
    %v241 = vld [vmem:[%s3 + $0x10] sm:$0xf]
    %v242 = vld [vmem:[%s3 + $0x14] sm:$0xf]
    %v243 = vld [vmem:[%s3 + $0x18] sm:$0xf]
    %v244 = vld [vmem:[%s3 + $0x1c] sm:$0xf]
    %v245 = vld [vmem:[%s3 + $0x20] sm:$0xf]
    %v246 = vld [vmem:[%s3 + $0x24] sm:$0xf]
    %v247 = vld [vmem:[%s3 + $0x28] sm:$0xf]
    %v248 = vld [vmem:[%s3 + $0x2c] sm:$0xf]
    %v249 = vld [vmem:[%s3 + $0x30] sm:$0xf]
    %v250 = vld [vmem:[%s3 + $0x34] sm:$0xf]
    %v251 = vld [vmem:[%s3 + $0x38] sm:$0xf]
    %v252 = vld [vmem:[%s3 + $0x3c] sm:$0xf]
    %v253 = vld [vmem:[%s3 + $0x40] sm:$0xf]
    %v254 = vld [vmem:[%s3 + $0x44] sm:$0xf]
    %v255 = vld [vmem:[%s3 + $0x48] sm:$0xf]
    %v256 = vld [vmem:[%s3 + $0x4c] sm:$0xf]
    %v257 = vld [vmem:[%s3 + $0x50] sm:$0xf]
    %v258 = vld [vmem:[%s3 + $0x54] sm:$0xf]
    %v259 = vld [vmem:[%s3 + $0x58] sm:$0xf]
    %v260 = vld [vmem:[%s3 + $0x5c] sm:$0xf]
    %v261 = vld [vmem:[%s4] sm:$0xf]
    %v262 = vld [vmem:[%s4 + $0x4] sm:$0xf]
    %v263 = vld [vmem:[%s4 + $0x8] sm:$0xf]
    %v264 = vld [vmem:[%s4 + $0xc] sm:$0xf]
    %v265 = vld [vmem:[%s4 + $0x10] sm:$0xf]
    %v266 = vld [vmem:[%s4 + $0x14] sm:$0xf]
    %v267 = vld [vmem:[%s4 + $0x18] sm:$0xf]
    %v268 = vld [vmem:[%s4 + $0x1c] sm:$0xf]
    %v269 = vld [vmem:[%s4 + $0x20] sm:$0xf]
    %v270 = vld [vmem:[%s4 + $0x24] sm:$0xf]
    %v271 = vld [vmem:[%s4 + $0x28] sm:$0xf]
    %v272 = vld [vmem:[%s4 + $0x2c] sm:$0xf]
    %v273 = vld [vmem:[%s4 + $0x30] sm:$0xf]
    %v274 = vld [vmem:[%s4 + $0x34] sm:$0xf]
    %v275 = vld [vmem:[%s4 + $0x38] sm:$0xf]
    %v276 = vld [vmem:[%s4 + $0x3c] sm:$0xf]
    %v277 = vld [vmem:[%s4 + $0x40] sm:$0xf]
    %v278 = vld [vmem:[%s4 + $0x44] sm:$0xf]
    %v279 = vld [vmem:[%s4 + $0x48] sm:$0xf]
    %v280 = vld [vmem:[%s4 + $0x4c] sm:$0xf]
    %v281 = vld [vmem:[%s4 + $0x50] sm:$0xf]
    %v282 = vld [vmem:[%s4 + $0x54] sm:$0xf]
    %v283 = vld [vmem:[%s4 + $0x58] sm:$0xf]
    %v284 = vld [vmem:[%s4 + $0x5c] sm:$0xf]
    %v309 = vunpack.c.l.b16 %v261
    %v310 = vunpack.c.l.b16 %v262
    %v311 = vunpack.c.l.b16 %v263
    %v312 = vunpack.c.l.b16 %v264
    %v313 = vunpack.c.l.b16 %v265
    %v314 = vunpack.c.l.b16 %v266
    %v315 = vunpack.c.l.b16 %v267
    %v316 = vunpack.c.l.b16 %v268
    %v317 = vunpack.c.l.b16 %v269
    %v318 = vunpack.c.l.b16 %v270
    %v319 = vunpack.c.l.b16 %v271
    %v320 = vunpack.c.l.b16 %v272
    %v321 = vunpack.c.l.b16 %v273
    %v322 = vunpack.c.l.b16 %v274
    %v323 = vunpack.c.l.b16 %v275
    %v324 = vunpack.c.l.b16 %v276
    %v325 = vunpack.c.l.b16 %v277
    %v326 = vunpack.c.l.b16 %v278
    %v327 = vunpack.c.l.b16 %v279
    %v328 = vunpack.c.l.b16 %v280
    %v329 = vunpack.c.l.b16 %v281
    %v330 = vunpack.c.l.b16 %v282
    %v331 = vunpack.c.l.b16 %v283
    %v332 = vunpack.c.l.b16 %v284
    %v333 = vpack.c.b16 %v310, %v309
    %v334 = vpack.c.b16 %v312, %v311
    %v335 = vpack.c.b16 %v314, %v313
    %v336 = vpack.c.b16 %v316, %v315
    %v337 = vpack.c.b16 %v318, %v317
    %v338 = vpack.c.b16 %v320, %v319
    %v339 = vpack.c.b16 %v322, %v321
    %v340 = vpack.c.b16 %v324, %v323
    %v341 = vpack.c.b16 %v326, %v325
    %v342 = vpack.c.b16 %v328, %v327
    %v343 = vpack.c.b16 %v330, %v329
    %v344 = vpack.c.b16 %v332, %v331
    %vm357 = vcmask 523264
    %v359 = vsel %vm357, %v236, 0
    %361 = vmatprep.subr.bf16.mxu0 0
    %362 = vmatpush1.bf16.msra.mxu0 %v340
    %363 = vmatprep.subr.bf16.mxu0 0
    %364 = vmatpush1.bf16.msra.mxu0 %v339
    %365 = vmatprep.subr.bf16.mxu0 0
    %366 = vmatpush1.bf16.msra.mxu0 %v338
    %367 = vmatprep.subr.bf16.mxu0 0
    %368 = vmatpush1.bf16.msra.mxu0 %v337
    %369 = vmatprep.subr.bf16.mxu0 0
    %370 = vmatpush1.bf16.msra.mxu0 %v336
    %371 = vmatprep.subr.bf16.mxu0 0
    %372 = vmatpush1.bf16.msra.mxu0 %v335
    %373 = vmatprep.subr.bf16.mxu0 0
    %374 = vmatpush1.bf16.msra.mxu0 %v334
    %375 = vmatprep.subr.bf16.mxu0 0
    %376 = vmatpush1.bf16.msra.mxu0 %v333
    %377 = vmatprep.subr.bf16.mxu0 0
    %378 = vmatpush2.bf16.msra.mxu0 0
    %379 = vmatprep.subr.bf16.mxu0 0
    %380 = vmatpush2.bf16.msra.mxu0 0
    %381 = vmatprep.subr.bf16.mxu0 0
    %382 = vmatpush2.bf16.msra.mxu0 0
    %383 = vmatprep.subr.bf16.mxu0 0
    %384 = vmatpush2.bf16.msra.mxu0 0
    %385 = vmatprep.subr.bf16.mxu0 0
    %386 = vmatpush2.bf16.msra.mxu0 %v344
    %387 = vmatprep.subr.bf16.mxu0 0
    %388 = vmatpush2.bf16.msra.mxu0 %v343
    %389 = vmatprep.subr.bf16.mxu0 0
    %390 = vmatpush2.bf16.msra.mxu0 %v342
    %391 = vmatprep.subr.bf16.mxu0 0
    %392 = vmatpush2.bf16.msra.mxu0 %v341
    %393 = vmatprep.mubr.bf16.mxu0 %v359
    %394 = vmatmul.mubr.bf16.gmra.mxu0 %v235
    %v395 = vpop.f32.mrf.mxu0
    %v396 = vadd.f32 0.0, %v395
    %v397 = vpop.f32.mrf.mxu0
    %v398 = vpop.f32.mrf.mxu0
    %v399 = vpop.f32.mrf.mxu0
    %400 = vdwg.mxu0
    %v425 = vunpack.c.l.b16 %v237
    %v426 = vunpack.c.l.b16 %v238
    %v427 = vunpack.c.l.b16 %v239
    %v428 = vunpack.c.l.b16 %v240
    %v429 = vunpack.c.l.b16 %v241
    %v430 = vunpack.c.l.b16 %v242
    %v431 = vunpack.c.l.b16 %v243
    %v432 = vunpack.c.l.b16 %v244
    %v433 = vunpack.c.l.b16 %v245
    %v434 = vunpack.c.l.b16 %v246
    %v435 = vunpack.c.l.b16 %v247
    %v436 = vunpack.c.l.b16 %v248
    %v437 = vunpack.c.l.b16 %v249
    %v438 = vunpack.c.l.b16 %v250
    %v439 = vunpack.c.l.b16 %v251
    %v440 = vunpack.c.l.b16 %v252
    %v441 = vunpack.c.l.b16 %v253
    %v442 = vunpack.c.l.b16 %v254
    %v443 = vunpack.c.l.b16 %v255
    %v444 = vunpack.c.l.b16 %v256
    %v445 = vunpack.c.l.b16 %v257
    %v446 = vunpack.c.l.b16 %v258
    %v447 = vunpack.c.l.b16 %v259
    %v448 = vunpack.c.l.b16 %v260
    %v449 = vpack.c.b16 %v426, %v425
    %v450 = vpack.c.b16 %v428, %v427
    %v451 = vpack.c.b16 %v430, %v429
    %v452 = vpack.c.b16 %v432, %v431
    %v453 = vpack.c.b16 %v434, %v433
    %v454 = vpack.c.b16 %v436, %v435
    %v455 = vpack.c.b16 %v438, %v437
    %v456 = vpack.c.b16 %v440, %v439
    %v457 = vpack.c.b16 %v442, %v441
    %v458 = vpack.c.b16 %v444, %v443
    %v459 = vpack.c.b16 %v446, %v445
    %v460 = vpack.c.b16 %v448, %v447
    %v474 = vsel %vm357, %v191, 0
    %476 = vmatprep.subr.bf16.mxu0 0
    %477 = vmatpush1.bf16.msra.mxu0 %v456
    %478 = vmatprep.subr.bf16.mxu0 0
    %479 = vmatpush1.bf16.msra.mxu0 %v455
    %480 = vmatprep.subr.bf16.mxu0 0
    %481 = vmatpush1.bf16.msra.mxu0 %v454
    %482 = vmatprep.subr.bf16.mxu0 0
    %483 = vmatpush1.bf16.msra.mxu0 %v453
    %484 = vmatprep.subr.bf16.mxu0 0
    %485 = vmatpush1.bf16.msra.mxu0 %v452
    %486 = vmatprep.subr.bf16.mxu0 0
    %487 = vmatpush1.bf16.msra.mxu0 %v451
    %488 = vmatprep.subr.bf16.mxu0 0
    %489 = vmatpush1.bf16.msra.mxu0 %v450
    %490 = vmatprep.subr.bf16.mxu0 0
    %491 = vmatpush1.bf16.msra.mxu0 %v449
    %492 = vmatprep.subr.bf16.mxu0 0
    %493 = vmatpush2.bf16.msra.mxu0 0
    %494 = vmatprep.subr.bf16.mxu0 0
    %495 = vmatpush2.bf16.msra.mxu0 0
    %496 = vmatprep.subr.bf16.mxu0 0
    %497 = vmatpush2.bf16.msra.mxu0 0
    %498 = vmatprep.subr.bf16.mxu0 0
    %499 = vmatpush2.bf16.msra.mxu0 0
    %500 = vmatprep.subr.bf16.mxu0 0
    %501 = vmatpush2.bf16.msra.mxu0 %v460
    %502 = vmatprep.subr.bf16.mxu0 0
    %503 = vmatpush2.bf16.msra.mxu0 %v459
    %504 = vmatprep.subr.bf16.mxu0 0
    %505 = vmatpush2.bf16.msra.mxu0 %v458
    %506 = vmatprep.subr.bf16.mxu0 0
    %507 = vmatpush2.bf16.msra.mxu0 %v457
    %508 = vmatprep.mubr.bf16.mxu0 %v474
    %509 = vmatmul.mubr.bf16.gmra.mxu0 %v190
    %v510 = vpop.f32.mrf.mxu0
    %v511 = vadd.f32 %v396, %v510
    %v512 = vpop.f32.mrf.mxu0
    %v513 = vpop.f32.mrf.mxu0
    %v514 = vpop.f32.mrf.mxu0
    %515 = vdwg.mxu0
    %v516 = vld [vmem:[%s5] sm:$0x1]
    %v517 = vadd.f32 %v511, %v516
    %v518 = vmax.f32 %v517, 0.0
    %519 = vst [vmem:[#allocation2] sm:$0x1] %v518
    // Predicated region
    $region26: #{tpu_custom_call.1} parent=1 // pred_check
      _
    $region27: #{tpu_custom_call.1} parent=1 // pred_check_branch
      %521 = sbr.rel (0) target = $region29
    $region28: #{tpu_custom_call.1} parent=1 // pred_region
      %s523 = ssub.s32 16, 16
      %524 = vsyncadd [#allocation3], %s523
      %s526 = sshll.u32 [#allocation2], 4
      %s527 = int_to_ptr.vmem [resolvable:$true] %s526
      %529 = dma.vmem_to_hbm [thread:$0]  %s527, 16, %s6, [#allocation3]
    $region29: #{tpu_custom_call.1} parent=1 // pred_fallthru
      _
    // Predicated region
    $region30: #{tpu_custom_call.1} parent=1 // pred_check
      _
    $region31: #{tpu_custom_call.1} parent=1 // pred_check_branch
      %531 = sbr.rel (0) target = $region33
    $region32: #{tpu_custom_call.1} parent=1 // pred_region
      %532 = dma.done [#allocation3], 16
    $region33: #{tpu_custom_call.1} parent=1 // pred_fallthru
      _
    %533 = vsyncpa [#allocation3], 1

</llo_original>
